<compile_context>
chip_gen: v6e
topology: v6e:2x2x1
jax: 0.10.0
libtpu: 0.0.40
codegen_flags: <defaults>
</compile_context>

<pallas_src>
import jax
import jax.numpy as jnp
from jax.experimental import pallas as pl
from jax.experimental.pallas import tpu as pltpu


# ------------------------------------------------------------ fused kernel --
def _make_fused_kernel(n_layers, hid_dim):
    H = hid_dim

    def kernel(*refs):
        tab_ref, node_ref, enc_ref, h0_ref, c0_ref = refs[:5]
        idx = 5
        layer_refs = [refs[idx:idx + 4]]          # layer 0: wfeat, wemb, whh, b
        idx += 4
        for _ in range(1, n_layers):              # layers >=1: wih, whh, b
            layer_refs.append(refs[idx:idx + 3])
            idx += 3
        wdec_ref, wctx_ref, bw_ref, wout_ref, bout_ref = refs[idx:idx + 5]
        idx += 5
        pred_ref, state_ref = refs[idx:idx + 2]

        f32 = jnp.float32
        bf16 = jnp.bfloat16
        L = tab_ref.shape[0]

        # ---- 1. tgt_emb = mean_L of gathered sigmoid(emb@W1+b1) rows --------
        tgt_emb = jnp.sum(tab_ref[...], axis=0) * (1.0 / L)        # (N, EH) f32

        # ---- 2. LSTM stack, one step, fused (Din,4H) gate matmuls -----------
        node_b = node_ref[...].astype(bf16)                        # (N, inp)
        emb_b = tgt_emb.astype(bf16)                               # (N, EH)
        x_b = None
        h_list, c_list = [], []
        for layer in range(n_layers):
            h_prev = h0_ref[layer]                                 # (N, H) f32
            c_prev = c0_ref[layer]
            h_prev_b = h_prev.astype(bf16)
            if layer == 0:
                wfeat, wemb, whh, b = layer_refs[0]
                # K-split matmuls replace concat([node_feat, tgt_emb]).
                gates = (jnp.dot(node_b, wfeat[...], preferred_element_type=f32)
                         + jnp.dot(emb_b, wemb[...], preferred_element_type=f32)
                         + jnp.dot(h_prev_b, whh[...], preferred_element_type=f32)
                         + b[...])                                 # (N, 4H) f32
            else:
                wih, whh, b = layer_refs[layer]
                gates = (jnp.dot(x_b, wih[...], preferred_element_type=f32)
                         + jnp.dot(h_prev_b, whh[...], preferred_element_type=f32)
                         + b[...])
            # PyTorch gate column order: i, f, g, o (static lane slices).
            i_g = jax.nn.sigmoid(gates[:, 0 * H:1 * H])
            f_g = jax.nn.sigmoid(gates[:, 1 * H:2 * H])
            g_g = jnp.tanh(gates[:, 2 * H:3 * H])
            o_g = jax.nn.sigmoid(gates[:, 3 * H:4 * H])
            c_new = f_g * c_prev + i_g * g_g
            h_new = o_g * jnp.tanh(c_new)
            h_list.append(h_new)
            c_list.append(c_new)
            x_b = h_new.astype(bf16)
        dec = h_list[-1]                                           # (N, H) f32

        # Packed lane-dense state slab: [h_0..h_{nl-1} | c_0..c_{nl-1}].
        for l in range(n_layers):
            state_ref[:, l * H:(l + 1) * H] = h_list[l]
            state_ref[:, (n_layers + l) * H:(n_layers + l + 1) * H] = c_list[l]

        # ---- 3. dot attention on VPU/XLU, enc in native (S, N, H) layout ----
        enc = enc_ref[...]                                         # (S, N, H)
        scores = jnp.sum(dec[None, :, :] * enc, axis=-1,
                         keepdims=True)                            # (S, N, 1)
        m = jnp.max(scores, axis=0, keepdims=True)                 # (1, N, 1)
        e = jnp.exp(scores - m)
        inv = pl.reciprocal(jnp.sum(e, axis=0, keepdims=True), approx=True)
        attn = e * inv                                             # (S, N, 1)
        ctx = jnp.sum(attn * enc, axis=0)                          # (N, H) f32

        # ---- 4. cats = tanh(dec@Wd + ctx@Wc + bw); pred = cats@Wout + bout --
        cats = jnp.tanh(
            jnp.dot(dec.astype(bf16), wdec_ref[...], preferred_element_type=f32)
            + jnp.dot(ctx.astype(bf16), wctx_ref[...], preferred_element_type=f32)
            + bw_ref[...])                                         # (N, H)
        pred_ref[...] = (jnp.dot(cats.astype(bf16), wout_ref[...],
                                 preferred_element_type=f32)
                         + bout_ref[...])                          # (N, Vpad)

    return kernel


# -------------------------------------------------------------- parameters --
def init_params(key, vocab_size, inp_dim, emb_dim, emb_hid_dim, hid_dim,
                n_layers):
    """PyTorch-layout parameters (Linear/LSTM weights stored transposed)."""
    assert emb_dim == hid_dim, "tied=True requires emb_dim == hid_dim"
    ks = jax.random.split(key, 16)

    def unif(k, shape, fan):
        bound = 1.0 / jnp.sqrt(float(fan))
        return jax.random.uniform(k, shape, jnp.float32, -bound, bound)

    p = {}
    p["emb"] = unif(ks[0], (vocab_size, emb_dim), emb_dim)
    p["w1_t"] = unif(ks[1], (emb_dim, emb_hid_dim), emb_dim)     # mlp1
    p["b1"] = unif(ks[2], (1, emb_hid_dim), emb_dim)
    lstm = []
    for layer in range(n_layers):
        din = (emb_hid_dim + inp_dim) if layer == 0 else hid_dim
        kk = jax.random.split(ks[3 + layer], 4)
        lstm.append({
            "wih_t": unif(kk[0], (din, 4 * hid_dim), hid_dim),
            "whh_t": unif(kk[1], (hid_dim, 4 * hid_dim), hid_dim),
            "b": unif(kk[2], (1, 4 * hid_dim), hid_dim)
                 + unif(kk[3], (1, 4 * hid_dim), hid_dim),       # b_ih + b_hh
        })
    p["lstm"] = lstm
    p["w_t"] = unif(ks[10], (2 * hid_dim, hid_dim), 2 * hid_dim)  # w: 2H -> H
    p["bw"] = unif(ks[11], (1, hid_dim), 2 * hid_dim)
    p["bout"] = unif(ks[12], (1, vocab_size), hid_dim)            # own bias
    return p


def prepare_params(p):
    """Re-pack into the kernel layout (done once, outside the hot path):
       * precompute the per-token sigmoid(emb @ W1 + b1) table (eval mode)
       * keep LSTM weights in PyTorch (Din, 4H) layout (fused gate matmuls),
         layer-0 W_ih row-split into node_feat / tgt_emb blocks
       * w (2H->H) row-split into dec / ctx blocks (K-split, no concat)
       * tied output projection lane-padded to a multiple of 128
       * matmul weights cast to bf16 (f32 accumulation in the kernel)."""
    f32, bf16 = jnp.float32, jnp.bfloat16
    emb = p["emb"]
    vocab, _E = emb.shape
    H = p["w_t"].shape[1]
    EH = p["w1_t"].shape[1]
    inp_dim = p["lstm"][0]["wih_t"].shape[0] - EH

    # Token -> sigmoid(emb @ W1 + b1) table (dropout = identity in eval).
    mlp_tab = jax.nn.sigmoid(
        jnp.dot(emb, p["w1_t"], precision=jax.lax.Precision.HIGHEST)
        + p["b1"]).astype(f32)                                    # (vocab, EH)

    layers = []
    for i, lp in enumerate(p["lstm"]):
        wih = lp["wih_t"].astype(bf16)            # (Din, 4H), i,f,g,o columns
        whh = lp["whh_t"].astype(bf16)            # (H, 4H)
        b = lp["b"].astype(f32)                   # (1, 4H)
        if i == 0:
            layers.append({"wih_feat": wih[:inp_dim, :],   # torch.cat order
                           "wih_emb": wih[inp_dim:, :],
                           "whh": whh, "b": b})
        else:
            layers.append({"wih": wih, "whh": whh, "b": b})

    vpad = ((vocab + 127) // 128) * 128
    # tied=True: out_projection.weight == emb.weight (snapshot; inference only)
    wout_pad = jnp.zeros((H, vpad), f32).at[:, :vocab].set(emb.T).astype(bf16)
    bout_pad = jnp.zeros((1, vpad), f32).at[:, :vocab].set(p["bout"])
    return {"mlp_tab": mlp_tab, "layers": layers,
            "w_dec": p["w_t"][:H, :].astype(bf16),
            "w_ctx": p["w_t"][H:, :].astype(bf16),
            "bw": p["bw"].astype(f32),
            "wout_pad": wout_pad, "bout_pad": bout_pad}


# ------------------------------------------------------------------ forward --
@jax.jit
def dec_rnn_forward(pack, tgt, enc_outs, node_feat, hidden):
    h0, c0 = hidden                                   # (n_layers, N, H) each
    n_layers, N, H = h0.shape
    L = tgt.shape[0]
    S = enc_outs.shape[0]
    EH = pack["mlp_tab"].shape[1]
    inp_dim = node_feat.shape[1]
    vocab = pack["mlp_tab"].shape[0]
    vpad = pack["wout_pad"].shape[1]

    # Tiny XLA gather of the precomputed sigmoid table (L*N*EH floats).
    # TODO(synk): fold this gather into the kernel via scalar-prefetch of tgt
    # + pl.Element row gather once L*N grows large.
    tab_gather = pack["mlp_tab"][tgt]                 # (L, N, EH)

    ins = [tab_gather, node_feat, enc_outs, h0, c0]
    l0 = pack["layers"][0]
    ins += [l0["wih_feat"], l0["wih_emb"], l0["whh"], l0["b"]]
    for lp in pack["layers"][1:]:
        ins += [lp["wih"], lp["whh"], lp["b"]]
    ins += [pack["w_dec"], pack["w_ctx"], pack["bw"],
            pack["wout_pad"], pack["bout_pad"]]

    out_shape = (
        jax.ShapeDtypeStruct((N, vpad), jnp.float32),              # pred_pad
        jax.ShapeDtypeStruct((N, 2 * n_layers * H), jnp.float32),  # h|c slab
    )

    # Advisory cost hint for XLA scheduling of the single fused custom call.
    flops = 2 * N * (4 * H * (inp_dim + EH + H)
                     + 4 * H * 2 * H * max(n_layers - 1, 0)
                     + 2 * S * H + 2 * H * H + H * vpad)
    trans = N * (n_layers * 5 * H + S + H + 1)
    bytes_accessed = (sum(int(a.size) * jnp.dtype(a.dtype).itemsize
                          for a in ins)
                      + (N * vpad + N * 2 * n_layers * H) * 4)
    cost = pl.CostEstimate(flops=int(flops), transcendentals=int(trans),
                           bytes_accessed=int(bytes_accessed))

    pred_pad, state = pl.pallas_call(
        _make_fused_kernel(n_layers, H),
        out_shape=out_shape,
        cost_estimate=cost,
        compiler_params=pltpu.CompilerParams(
            vmem_limit_bytes=32 * 1024 * 1024),
    )(*ins)

    h_new = state[:, :n_layers * H].reshape(N, n_layers, H).transpose(1, 0, 2)
    c_new = state[:, n_layers * H:].reshape(N, n_layers, H).transpose(1, 0, 2)
    return pred_pad[:, :vocab], (h_new, c_new)


# --------------------------------------------------- pure-JAX reference ------
def reference_forward(p, tgt, enc_outs, node_feat, hidden):
    HI = jax.lax.Precision.HIGHEST
    h0, c0 = hidden
    H = h0.shape[2]
    emb = p["emb"][tgt]                                           # (L, N, E)
    hm = jax.nn.sigmoid(
        jnp.einsum('lne,ef->lnf', emb, p["w1_t"], precision=HI) + p["b1"])
    tgt_emb = jnp.mean(hm, axis=0)                                # (N, EH)
    inp = jnp.concatenate([node_feat, tgt_emb], axis=1)
    hs, cs = [], []
    for layer, lp in enumerate(p["lstm"]):
        gates = (jnp.dot(inp, lp["wih_t"], precision=HI)
                 + jnp.dot(h0[layer], lp["whh_t"], precision=HI) + lp["b"])
        i = jax.nn.sigmoid(gates[:, :H])
        f = jax.nn.sigmoid(gates[:, H:2 * H])
        g = jnp.tanh(gates[:, 2 * H:3 * H])
        o = jax.nn.sigmoid(gates[:, 3 * H:])
        c_new = f * c0[layer] + i * g
        h_new = o * jnp.tanh(c_new)
        hs.append(h_new)
        cs.append(c_new)
        inp = h_new
    dec = inp
    scores = jnp.sum(dec[None, :, :] * enc_outs, axis=2)          # (S, N)
    attn = jax.nn.softmax(scores, axis=0)
    ctx = jnp.sum(attn[:, :, None] * enc_outs, axis=0)            # (N, H)
    cats = jnp.tanh(jnp.dot(jnp.concatenate([dec, ctx], axis=1), p["w_t"],
                            precision=HI) + p["bw"])
    pred = jnp.dot(cats, p["emb"].T, precision=HI) + p["bout"]
    return pred, (jnp.stack(hs), jnp.stack(cs))


# --------------------------------------------------------------------- main --
if __name__ == "__main__":
    VOCAB, INP_DIM, EMB_DIM, EMB_HID, HID, N_LAYERS = 50, 24, 32, 16, 32, 2
    N_NODES, L_TGT, S_SRC = 8, 6, 10

    key = jax.random.PRNGKey(0)
    k_par, k_tgt, k_enc, k_feat, k_h, k_c = jax.random.split(key, 6)

    params = init_params(k_par, VOCAB, INP_DIM, EMB_DIM, EMB_HID, HID,
                         N_LAYERS)
    pack = prepare_params(params)

    tgt = jax.random.randint(k_tgt, (L_TGT, N_NODES), 0, VOCAB, jnp.int32)
    enc_outs = jax.random.normal(k_enc, (S_SRC, N_NODES, HID), jnp.float32)
    node_feat = jax.random.normal(k_feat, (N_NODES, INP_DIM), jnp.float32)
    h0 = jax.random.normal(k_h, (N_LAYERS, N_NODES, HID), jnp.float32)
    c0 = jax.random.normal(k_c, (N_LAYERS, N_NODES, HID), jnp.float32)

    pred, (h_new, c_new) = dec_rnn_forward(pack, tgt, enc_outs, node_feat,
                                           (h0, c0))
    jax.block_until_ready((pred, h_new, c_new))

    assert pred.shape == (N_NODES, VOCAB)
    assert h_new.shape == (N_LAYERS, N_NODES, HID)
    assert c_new.shape == (N_LAYERS, N_NODES, HID)
    assert bool(jnp.all(jnp.isfinite(pred)))

    # Cross-check against a pure-JAX f32 reference of the same forward math
    # (kernel uses bf16 MXU operands + approx reciprocal; 1e-1 tolerance).
    pred_ref, (h_ref, c_ref) = reference_forward(params, tgt, enc_outs,
                                                 node_feat, (h0, c0))
    assert float(jnp.max(jnp.abs(pred - pred_ref))) < 1e-1
    assert float(jnp.max(jnp.abs(h_new - h_ref))) < 1e-1
    assert float(jnp.max(jnp.abs(c_new - c_ref))) < 1e-1

    print("KERNEL_OK")
</pallas_src>

<mosaic_0001>
module attributes {stable_mosaic.version = 11 : i64} {
  func.func @kernel(%arg0: memref<6x8x16xf32, #tpu.memory_space<vmem>>, %arg1: memref<8x24xf32, #tpu.memory_space<vmem>>, %arg2: memref<10x8x32xf32, #tpu.memory_space<vmem>>, %arg3: memref<2x8x32xf32, #tpu.memory_space<vmem>>, %arg4: memref<2x8x32xf32, #tpu.memory_space<vmem>>, %arg5: memref<24x128xbf16, #tpu.memory_space<vmem>>, %arg6: memref<16x128xbf16, #tpu.memory_space<vmem>>, %arg7: memref<32x128xbf16, #tpu.memory_space<vmem>>, %arg8: memref<1x128xf32, #tpu.memory_space<vmem>>, %arg9: memref<32x128xbf16, #tpu.memory_space<vmem>>, %arg10: memref<32x128xbf16, #tpu.memory_space<vmem>>, %arg11: memref<1x128xf32, #tpu.memory_space<vmem>>, %arg12: memref<32x32xbf16, #tpu.memory_space<vmem>>, %arg13: memref<32x32xbf16, #tpu.memory_space<vmem>>, %arg14: memref<1x32xf32, #tpu.memory_space<vmem>>, %arg15: memref<32x128xbf16, #tpu.memory_space<vmem>>, %arg16: memref<1x128xf32, #tpu.memory_space<vmem>>, %arg17: memref<8x128xf32, #tpu.memory_space<vmem>>, %arg18: memref<8x128xf32, #tpu.memory_space<vmem>>) attributes {dimension_semantics = [], scalar_prefetch = 0 : i64, scratch_operands = 0 : i64, tpu.core_type = #tpu.core_type<tc>} {
    %c0 = arith.constant 0 : index
    %c0_0 = arith.constant 0 : index
    %c0_1 = arith.constant 0 : index
    %0 = vector.load %arg0[%c0, %c0_0, %c0_1] : memref<6x8x16xf32, #tpu.memory_space<vmem>>, vector<6x8x16xf32>
    %cst = arith.constant dense<0.000000e+00> : vector<8x16xf32>
    %1 = vector.multi_reduction <add>, %0, %cst [0] : vector<6x8x16xf32> to vector<8x16xf32>
    %cst_2 = arith.constant 0.166666672 : f32
    %2 = vector.broadcast %cst_2 : f32 to vector<8x16xf32>
    %3 = arith.mulf %1, %2 : vector<8x16xf32>
    %c0_3 = arith.constant 0 : index
    %c0_4 = arith.constant 0 : index
    %4 = vector.load %arg1[%c0_3, %c0_4] : memref<8x24xf32, #tpu.memory_space<vmem>>, vector<8x24xf32>
    %5 = arith.truncf %4 : vector<8x24xf32> to vector<8x24xbf16>
    %6 = arith.truncf %3 : vector<8x16xf32> to vector<8x16xbf16>
    %c0_5 = arith.constant 0 : index
    %c0_6 = arith.constant 0 : index
    %c0_7 = arith.constant 0 : index
    %7 = vector.load %arg3[%c0_5, %c0_6, %c0_7] : memref<2x8x32xf32, #tpu.memory_space<vmem>>, vector<1x8x32xf32>
    %8 = vector.shape_cast %7 : vector<1x8x32xf32> to vector<8x32xf32>
    %c0_8 = arith.constant 0 : index
    %c0_9 = arith.constant 0 : index
    %c0_10 = arith.constant 0 : index
    %9 = vector.load %arg4[%c0_8, %c0_9, %c0_10] : memref<2x8x32xf32, #tpu.memory_space<vmem>>, vector<1x8x32xf32>
    %10 = vector.shape_cast %9 : vector<1x8x32xf32> to vector<8x32xf32>
    %11 = arith.truncf %8 : vector<8x32xf32> to vector<8x32xbf16>
    %c0_11 = arith.constant 0 : index
    %c0_12 = arith.constant 0 : index
    %12 = vector.load %arg5[%c0_11, %c0_12] : memref<24x128xbf16, #tpu.memory_space<vmem>>, vector<24x128xbf16>
    %cst_13 = arith.constant dense<0.000000e+00> : vector<8x128xf32>
    %13 = tpu.matmul %5, %12, %cst_13 {dimension_numbers = #tpu.dot_dimension_numbers<[1], [0], [0], [1], [0, 0, 1, 1], [], []>} : vector<8x24xbf16>, vector<24x128xbf16>, vector<8x128xf32> -> vector<8x128xf32>
    %c0_14 = arith.constant 0 : index
    %c0_15 = arith.constant 0 : index
    %14 = vector.load %arg6[%c0_14, %c0_15] : memref<16x128xbf16, #tpu.memory_space<vmem>>, vector<16x128xbf16>
    %cst_16 = arith.constant dense<0.000000e+00> : vector<8x128xf32>
    %15 = tpu.matmul %6, %14, %cst_16 {dimension_numbers = #tpu.dot_dimension_numbers<[1], [0], [0], [1], [0, 0, 1, 1], [], []>} : vector<8x16xbf16>, vector<16x128xbf16>, vector<8x128xf32> -> vector<8x128xf32>
    %16 = arith.addf %13, %15 : vector<8x128xf32>
    %c0_17 = arith.constant 0 : index
    %c0_18 = arith.constant 0 : index
    %17 = vector.load %arg7[%c0_17, %c0_18] : memref<32x128xbf16, #tpu.memory_space<vmem>>, vector<32x128xbf16>
    %cst_19 = arith.constant dense<0.000000e+00> : vector<8x128xf32>
    %18 = tpu.matmul %11, %17, %cst_19 {dimension_numbers = #tpu.dot_dimension_numbers<[1], [0], [0], [1], [0, 0, 1, 1], [], []>} : vector<8x32xbf16>, vector<32x128xbf16>, vector<8x128xf32> -> vector<8x128xf32>
    %19 = arith.addf %16, %18 : vector<8x128xf32>
    %c0_20 = arith.constant 0 : index
    %c0_21 = arith.constant 0 : index
    %20 = vector.load %arg8[%c0_20, %c0_21] : memref<1x128xf32, #tpu.memory_space<vmem>>, vector<1x128xf32>
    %21 = vector.broadcast %20 : vector<1x128xf32> to vector<8x128xf32>
    %22 = arith.addf %19, %21 : vector<8x128xf32>
    %23 = vector.extract_strided_slice %22 {offsets = [0, 0], sizes = [8, 32], strides = [1, 1]} : vector<8x128xf32> to vector<8x32xf32>
    %24 = arith.negf %23 : vector<8x32xf32>
    %25 = math.exp %24 : vector<8x32xf32>
    %cst_22 = arith.constant 1.000000e+00 : f32
    %26 = vector.broadcast %cst_22 : f32 to vector<8x32xf32>
    %27 = arith.addf %26, %25 : vector<8x32xf32>
    %28 = arith.divf %26, %27 : vector<8x32xf32>
    %29 = vector.extract_strided_slice %22 {offsets = [0, 32], sizes = [8, 32], strides = [1, 1]} : vector<8x128xf32> to vector<8x32xf32>
    %30 = arith.negf %29 : vector<8x32xf32>
    %31 = math.exp %30 : vector<8x32xf32>
    %cst_23 = arith.constant 1.000000e+00 : f32
    %32 = vector.broadcast %cst_23 : f32 to vector<8x32xf32>
    %33 = arith.addf %32, %31 : vector<8x32xf32>
    %34 = arith.divf %32, %33 : vector<8x32xf32>
    %35 = vector.extract_strided_slice %22 {offsets = [0, 64], sizes = [8, 32], strides = [1, 1]} : vector<8x128xf32> to vector<8x32xf32>
    %36 = math.tanh %35 : vector<8x32xf32>
    %37 = vector.extract_strided_slice %22 {offsets = [0, 96], sizes = [8, 32], strides = [1, 1]} : vector<8x128xf32> to vector<8x32xf32>
    %38 = arith.negf %37 : vector<8x32xf32>
    %39 = math.exp %38 : vector<8x32xf32>
    %cst_24 = arith.constant 1.000000e+00 : f32
    %40 = vector.broadcast %cst_24 : f32 to vector<8x32xf32>
    %41 = arith.addf %40, %39 : vector<8x32xf32>
    %42 = arith.divf %40, %41 : vector<8x32xf32>
    %43 = arith.mulf %34, %10 : vector<8x32xf32>
    %44 = arith.mulf %28, %36 : vector<8x32xf32>
    %45 = arith.addf %43, %44 : vector<8x32xf32>
    %46 = math.tanh %45 : vector<8x32xf32>
    %47 = arith.mulf %42, %46 : vector<8x32xf32>
    %48 = arith.truncf %47 : vector<8x32xf32> to vector<8x32xbf16>
    %c1 = arith.constant 1 : index
    %c0_25 = arith.constant 0 : index
    %c0_26 = arith.constant 0 : index
    %49 = vector.load %arg3[%c1, %c0_25, %c0_26] : memref<2x8x32xf32, #tpu.memory_space<vmem>>, vector<1x8x32xf32>
    %50 = vector.shape_cast %49 : vector<1x8x32xf32> to vector<8x32xf32>
    %c1_27 = arith.constant 1 : index
    %c0_28 = arith.constant 0 : index
    %c0_29 = arith.constant 0 : index
    %51 = vector.load %arg4[%c1_27, %c0_28, %c0_29] : memref<2x8x32xf32, #tpu.memory_space<vmem>>, vector<1x8x32xf32>
    %52 = vector.shape_cast %51 : vector<1x8x32xf32> to vector<8x32xf32>
    %53 = arith.truncf %50 : vector<8x32xf32> to vector<8x32xbf16>
    %c0_30 = arith.constant 0 : index
    %c0_31 = arith.constant 0 : index
    %54 = vector.load %arg9[%c0_30, %c0_31] : memref<32x128xbf16, #tpu.memory_space<vmem>>, vector<32x128xbf16>
    %cst_32 = arith.constant dense<0.000000e+00> : vector<8x128xf32>
    %55 = tpu.matmul %48, %54, %cst_32 {dimension_numbers = #tpu.dot_dimension_numbers<[1], [0], [0], [1], [0, 0, 1, 1], [], []>} : vector<8x32xbf16>, vector<32x128xbf16>, vector<8x128xf32> -> vector<8x128xf32>
    %c0_33 = arith.constant 0 : index
    %c0_34 = arith.constant 0 : index
    %56 = vector.load %arg10[%c0_33, %c0_34] : memref<32x128xbf16, #tpu.memory_space<vmem>>, vector<32x128xbf16>
    %cst_35 = arith.constant dense<0.000000e+00> : vector<8x128xf32>
    %57 = tpu.matmul %53, %56, %cst_35 {dimension_numbers = #tpu.dot_dimension_numbers<[1], [0], [0], [1], [0, 0, 1, 1], [], []>} : vector<8x32xbf16>, vector<32x128xbf16>, vector<8x128xf32> -> vector<8x128xf32>
    %58 = arith.addf %55, %57 : vector<8x128xf32>
    %c0_36 = arith.constant 0 : index
    %c0_37 = arith.constant 0 : index
    %59 = vector.load %arg11[%c0_36, %c0_37] : memref<1x128xf32, #tpu.memory_space<vmem>>, vector<1x128xf32>
    %60 = vector.broadcast %59 : vector<1x128xf32> to vector<8x128xf32>
    %61 = arith.addf %58, %60 : vector<8x128xf32>
    %62 = vector.extract_strided_slice %61 {offsets = [0, 0], sizes = [8, 32], strides = [1, 1]} : vector<8x128xf32> to vector<8x32xf32>
    %63 = arith.negf %62 : vector<8x32xf32>
    %64 = math.exp %63 : vector<8x32xf32>
    %cst_38 = arith.constant 1.000000e+00 : f32
    %65 = vector.broadcast %cst_38 : f32 to vector<8x32xf32>
    %66 = arith.addf %65, %64 : vector<8x32xf32>
    %67 = arith.divf %65, %66 : vector<8x32xf32>
    %68 = vector.extract_strided_slice %61 {offsets = [0, 32], sizes = [8, 32], strides = [1, 1]} : vector<8x128xf32> to vector<8x32xf32>
    %69 = arith.negf %68 : vector<8x32xf32>
    %70 = math.exp %69 : vector<8x32xf32>
    %cst_39 = arith.constant 1.000000e+00 : f32
    %71 = vector.broadcast %cst_39 : f32 to vector<8x32xf32>
    %72 = arith.addf %71, %70 : vector<8x32xf32>
    %73 = arith.divf %71, %72 : vector<8x32xf32>
    %74 = vector.extract_strided_slice %61 {offsets = [0, 64], sizes = [8, 32], strides = [1, 1]} : vector<8x128xf32> to vector<8x32xf32>
    %75 = math.tanh %74 : vector<8x32xf32>
    %76 = vector.extract_strided_slice %61 {offsets = [0, 96], sizes = [8, 32], strides = [1, 1]} : vector<8x128xf32> to vector<8x32xf32>
    %77 = arith.negf %76 : vector<8x32xf32>
    %78 = math.exp %77 : vector<8x32xf32>
    %cst_40 = arith.constant 1.000000e+00 : f32
    %79 = vector.broadcast %cst_40 : f32 to vector<8x32xf32>
    %80 = arith.addf %79, %78 : vector<8x32xf32>
    %81 = arith.divf %79, %80 : vector<8x32xf32>
    %82 = arith.mulf %73, %52 : vector<8x32xf32>
    %83 = arith.mulf %67, %75 : vector<8x32xf32>
    %84 = arith.addf %82, %83 : vector<8x32xf32>
    %85 = math.tanh %84 : vector<8x32xf32>
    %86 = arith.mulf %81, %85 : vector<8x32xf32>
    %c0_41 = arith.constant 0 : index
    %c0_42 = arith.constant 0 : index
    %87 = vector.load %arg18[%c0_41, %c0_42] : memref<8x128xf32, #tpu.memory_space<vmem>>, vector<8x32xf32>
    tpu.vector_store %arg18[%c0_41, %c0_42], %47 {strides = array<i32>} : memref<8x128xf32, #tpu.memory_space<vmem>>, vector<8x32xf32>,
    %c0_43 = arith.constant 0 : index
    %c64 = arith.constant 64 : index
    %88 = vector.load %arg18[%c0_43, %c64] : memref<8x128xf32, #tpu.memory_space<vmem>>, vector<8x32xf32>
    tpu.vector_store %arg18[%c0_43, %c64], %45 {strides = array<i32>} : memref<8x128xf32, #tpu.memory_space<vmem>>, vector<8x32xf32>,
    %c0_44 = arith.constant 0 : index
    %c32 = arith.constant 32 : index
    %89 = vector.load %arg18[%c0_44, %c32] : memref<8x128xf32, #tpu.memory_space<vmem>>, vector<8x32xf32>
    tpu.vector_store %arg18[%c0_44, %c32], %86 {strides = array<i32>} : memref<8x128xf32, #tpu.memory_space<vmem>>, vector<8x32xf32>,
    %c0_45 = arith.constant 0 : index
    %c96 = arith.constant 96 : index
    %90 = vector.load %arg18[%c0_45, %c96] : memref<8x128xf32, #tpu.memory_space<vmem>>, vector<8x32xf32>
    tpu.vector_store %arg18[%c0_45, %c96], %84 {strides = array<i32>} : memref<8x128xf32, #tpu.memory_space<vmem>>, vector<8x32xf32>,
    %c0_46 = arith.constant 0 : index
    %c0_47 = arith.constant 0 : index
    %c0_48 = arith.constant 0 : index
    %91 = vector.load %arg2[%c0_46, %c0_47, %c0_48] : memref<10x8x32xf32, #tpu.memory_space<vmem>>, vector<10x8x32xf32>
    %92 = vector.shape_cast %86 : vector<8x32xf32> to vector<1x8x32xf32>
    %93 = vector.broadcast %92 : vector<1x8x32xf32> to vector<10x8x32xf32>
    %94 = arith.mulf %93, %91 : vector<10x8x32xf32>
    %cst_49 = arith.constant dense<0.000000e+00> : vector<10x8xf32>
    %95 = vector.multi_reduction <add>, %94, %cst_49 [2] : vector<10x8x32xf32> to vector<10x8xf32>
    %96 = vector.shape_cast %95 : vector<10x8xf32> to vector<10x8x1xf32>
    %cst_50 = arith.constant dense<0xFF800000> : vector<8x1xf32>
    %97 = vector.multi_reduction <maximumf>, %96, %cst_50 [0] : vector<10x8x1xf32> to vector<8x1xf32>
    %98 = vector.shape_cast %97 : vector<8x1xf32> to vector<1x8x1xf32>
    %99 = vector.broadcast %98 : vector<1x8x1xf32> to vector<10x8x1xf32>
    %100 = arith.subf %96, %99 : vector<10x8x1xf32>
    %101 = math.exp %100 : vector<10x8x1xf32>
    %cst_51 = arith.constant dense<0.000000e+00> : vector<8x1xf32>
    %102 = vector.multi_reduction <add>, %101, %cst_51 [0] : vector<10x8x1xf32> to vector<8x1xf32>
    %103 = vector.shape_cast %102 : vector<8x1xf32> to vector<1x8x1xf32>
    %104 = tpu.reciprocal %103 {approx = true} : vector<1x8x1xf32> -> vector<1x8x1xf32>
    %105 = vector.broadcast %104 : vector<1x8x1xf32> to vector<10x8x1xf32>
    %106 = arith.mulf %101, %105 : vector<10x8x1xf32>
    %107 = vector.broadcast %106 : vector<10x8x1xf32> to vector<10x8x32xf32>
    %108 = arith.mulf %107, %91 : vector<10x8x32xf32>
    %cst_52 = arith.constant dense<0.000000e+00> : vector<8x32xf32>
    %109 = vector.multi_reduction <add>, %108, %cst_52 [0] : vector<10x8x32xf32> to vector<8x32xf32>
    %110 = arith.truncf %86 : vector<8x32xf32> to vector<8x32xbf16>
    %c0_53 = arith.constant 0 : index
    %c0_54 = arith.constant 0 : index
    %111 = vector.load %arg12[%c0_53, %c0_54] : memref<32x32xbf16, #tpu.memory_space<vmem>>, vector<32x32xbf16>
    %cst_55 = arith.constant dense<0.000000e+00> : vector<8x32xf32>
    %112 = tpu.matmul %110, %111, %cst_55 {dimension_numbers = #tpu.dot_dimension_numbers<[1], [0], [0], [1], [0, 0, 1, 1], [], []>} : vector<8x32xbf16>, vector<32x32xbf16>, vector<8x32xf32> -> vector<8x32xf32>
    %113 = arith.truncf %109 : vector<8x32xf32> to vector<8x32xbf16>
    %c0_56 = arith.constant 0 : index
    %c0_57 = arith.constant 0 : index
    %114 = vector.load %arg13[%c0_56, %c0_57] : memref<32x32xbf16, #tpu.memory_space<vmem>>, vector<32x32xbf16>
    %cst_58 = arith.constant dense<0.000000e+00> : vector<8x32xf32>
    %115 = tpu.matmul %113, %114, %cst_58 {dimension_numbers = #tpu.dot_dimension_numbers<[1], [0], [0], [1], [0, 0, 1, 1], [], []>} : vector<8x32xbf16>, vector<32x32xbf16>, vector<8x32xf32> -> vector<8x32xf32>
    %116 = arith.addf %112, %115 : vector<8x32xf32>
    %c0_59 = arith.constant 0 : index
    %c0_60 = arith.constant 0 : index
    %117 = vector.load %arg14[%c0_59, %c0_60] : memref<1x32xf32, #tpu.memory_space<vmem>>, vector<1x32xf32>
    %118 = vector.broadcast %117 : vector<1x32xf32> to vector<8x32xf32>
    %119 = arith.addf %116, %118 : vector<8x32xf32>
    %120 = math.tanh %119 : vector<8x32xf32>
    %121 = arith.truncf %120 : vector<8x32xf32> to vector<8x32xbf16>
    %c0_61 = arith.constant 0 : index
    %c0_62 = arith.constant 0 : index
    %122 = vector.load %arg15[%c0_61, %c0_62] : memref<32x128xbf16, #tpu.memory_space<vmem>>, vector<32x128xbf16>
    %cst_63 = arith.constant dense<0.000000e+00> : vector<8x128xf32>
    %123 = tpu.matmul %121, %122, %cst_63 {dimension_numbers = #tpu.dot_dimension_numbers<[1], [0], [0], [1], [0, 0, 1, 1], [], []>} : vector<8x32xbf16>, vector<32x128xbf16>, vector<8x128xf32> -> vector<8x128xf32>
    %c0_64 = arith.constant 0 : index
    %c0_65 = arith.constant 0 : index
    %124 = vector.load %arg16[%c0_64, %c0_65] : memref<1x128xf32, #tpu.memory_space<vmem>>, vector<1x128xf32>
    %125 = vector.broadcast %124 : vector<1x128xf32> to vector<8x128xf32>
    %126 = arith.addf %123, %125 : vector<8x128xf32>
    %c0_66 = arith.constant 0 : index
    %c0_67 = arith.constant 0 : index
    %127 = vector.load %arg17[%c0_66, %c0_67] : memref<8x128xf32, #tpu.memory_space<vmem>>, vector<8x128xf32>
    tpu.vector_store %arg17[%c0_66, %c0_67], %126 {strides = array<i32>} : memref<8x128xf32, #tpu.memory_space<vmem>>, vector<8x128xf32>,
    return
  }
}

</mosaic_0001>

<llo_original>
// kernel: dec_rnn_forward.1
$region0: #{dec_rnn_forward.1}
  #allocation0 [shape = 'u32[]', space=smem, size = 0x4, offset = 0x4, fixed_abs, tag = 'smem constant byte address 0x4 - core index']
  #allocation1 [shape = 'u32[144,128]{1,0:T(1,128)}', space=vmem, size = 0x12000, scoped, tag = 'internal scratch']
  %s0 = inlined_call_operand.vmem [shape: f32[6,8,16], index: 0, kind: input, shape index: {}]
  %s1 = inlined_call_operand.vmem [shape: f32[8,24], index: 1, kind: input, shape index: {}]
  %s2 = inlined_call_operand.vmem [shape: f32[10,8,32], index: 2, kind: input, shape index: {}]
  %s3 = inlined_call_operand.vmem [shape: f32[2,8,32], index: 3, kind: input, shape index: {}]
  %s4 = inlined_call_operand.vmem [shape: f32[2,8,32], index: 4, kind: input, shape index: {}]
  %s5 = inlined_call_operand.vmem [shape: bf16[24,128], index: 5, kind: input, shape index: {}]
  %s6 = inlined_call_operand.vmem [shape: bf16[16,128], index: 6, kind: input, shape index: {}]
  %s7 = inlined_call_operand.vmem [shape: bf16[32,128], index: 7, kind: input, shape index: {}]
  %s8 = inlined_call_operand.vmem [shape: f32[1,128], index: 8, kind: input, shape index: {}]
  %s9 = inlined_call_operand.vmem [shape: bf16[32,128], index: 9, kind: input, shape index: {}]
  %s10 = inlined_call_operand.vmem [shape: bf16[32,128], index: 10, kind: input, shape index: {}]
  %s11 = inlined_call_operand.vmem [shape: f32[1,128], index: 11, kind: input, shape index: {}]
  %s12 = inlined_call_operand.vmem [shape: bf16[32,32], index: 12, kind: input, shape index: {}]
  %s13 = inlined_call_operand.vmem [shape: bf16[32,32], index: 13, kind: input, shape index: {}]
  %s14 = inlined_call_operand.vmem [shape: f32[1,32], index: 14, kind: input, shape index: {}]
  %s15 = inlined_call_operand.vmem [shape: bf16[32,128], index: 15, kind: input, shape index: {}]
  %s16 = inlined_call_operand.vmem [shape: f32[1,128], index: 16, kind: input, shape index: {}]
  %s17 = inlined_call_operand.hbm [shape: f32[8,128], index: 17, kind: output, shape index: {0}]
  %s18 = inlined_call_operand.vmem [shape: f32[8,128], index: 18, kind: output, shape index: {1}]
  %19 = xla_tuple %s17, %s18
  %s20 = sld [smem:[#allocation0]]
  $region86: #{dec_rnn_forward.1} parent=0
    _
  %s22 = ssub.s32 1, %s20
  %s23 = scalar_select 0, %s22, %s20
  $region1: #{dec_rnn_forward.1} parent=0
    #allocation2 [shape = 'u8[4096]{0}', space=vmem, size = 0x1000, scoped, tag = 'output window, operand 0, single buffered']
    #allocation3 [shape = 's32[1]{0}', space=sflag, size = 0x4, scoped, tag = 'scoped memory for dec_rnn_forward.1']
    %24 = vsyncpa [#allocation3], 0
    // Predicated region
    $region2: #{dec_rnn_forward.1} parent=1 // pred_check
      _
    $region3: #{dec_rnn_forward.1} parent=1 // pred_check_branch
      %26 = sbr.rel (0) target = $region5
    $region4: #{dec_rnn_forward.1} parent=1 // pred_region
      _
    $region5: #{dec_rnn_forward.1} parent=1 // pred_fallthru
      _
    // Predicated region
    $region6: #{dec_rnn_forward.1} parent=1 // pred_check
      _
    $region7: #{dec_rnn_forward.1} parent=1 // pred_check_branch
      %28 = sbr.rel (0) target = $region9
    $region8: #{dec_rnn_forward.1} parent=1 // pred_region
      _
    $region9: #{dec_rnn_forward.1} parent=1 // pred_fallthru
      _
    // Predicated region
    $region10: #{dec_rnn_forward.1} parent=1 // pred_check
      _
    $region11: #{dec_rnn_forward.1} parent=1 // pred_check_branch
      %30 = sbr.rel (0) target = $region13
    $region12: #{dec_rnn_forward.1} parent=1 // pred_region
      _
    $region13: #{dec_rnn_forward.1} parent=1 // pred_fallthru
      _
    // Predicated region
    $region14: #{dec_rnn_forward.1} parent=1 // pred_check
      _
    $region15: #{dec_rnn_forward.1} parent=1 // pred_check_branch
      %32 = sbr.rel (0) target = $region17
    $region16: #{dec_rnn_forward.1} parent=1 // pred_region
      _
    $region17: #{dec_rnn_forward.1} parent=1 // pred_fallthru
      _
    // Predicated region
    $region18: #{dec_rnn_forward.1} parent=1 // pred_check
      _
    $region19: #{dec_rnn_forward.1} parent=1 // pred_check_branch
      %34 = sbr.rel (0) target = $region21
    $region20: #{dec_rnn_forward.1} parent=1 // pred_region
      _
    $region21: #{dec_rnn_forward.1} parent=1 // pred_fallthru
      _
    // Predicated region
    $region22: #{dec_rnn_forward.1} parent=1 // pred_check
      _
    $region23: #{dec_rnn_forward.1} parent=1 // pred_check_branch
      %36 = sbr.rel (0) target = $region25
    $region24: #{dec_rnn_forward.1} parent=1 // pred_region
      _
    $region25: #{dec_rnn_forward.1} parent=1 // pred_fallthru
      _
    // Predicated region
    $region26: #{dec_rnn_forward.1} parent=1 // pred_check
      _
    $region27: #{dec_rnn_forward.1} parent=1 // pred_check_branch
      %38 = sbr.rel (0) target = $region29
    $region28: #{dec_rnn_forward.1} parent=1 // pred_region
      _
    $region29: #{dec_rnn_forward.1} parent=1 // pred_fallthru
      _
    // Predicated region
    $region30: #{dec_rnn_forward.1} parent=1 // pred_check
      _
    $region31: #{dec_rnn_forward.1} parent=1 // pred_check_branch
      %40 = sbr.rel (0) target = $region33
    $region32: #{dec_rnn_forward.1} parent=1 // pred_region
      _
    $region33: #{dec_rnn_forward.1} parent=1 // pred_fallthru
      _
    // Predicated region
    $region34: #{dec_rnn_forward.1} parent=1 // pred_check
      _
    $region35: #{dec_rnn_forward.1} parent=1 // pred_check_branch
      %42 = sbr.rel (0) target = $region37
    $region36: #{dec_rnn_forward.1} parent=1 // pred_region
      _
    $region37: #{dec_rnn_forward.1} parent=1 // pred_fallthru
      _
    // Predicated region
    $region38: #{dec_rnn_forward.1} parent=1 // pred_check
      _
    $region39: #{dec_rnn_forward.1} parent=1 // pred_check_branch
      %44 = sbr.rel (0) target = $region41
    $region40: #{dec_rnn_forward.1} parent=1 // pred_region
      _
    $region41: #{dec_rnn_forward.1} parent=1 // pred_fallthru
      _
    // Predicated region
    $region42: #{dec_rnn_forward.1} parent=1 // pred_check
      _
    $region43: #{dec_rnn_forward.1} parent=1 // pred_check_branch
      %46 = sbr.rel (0) target = $region45
    $region44: #{dec_rnn_forward.1} parent=1 // pred_region
      _
    $region45: #{dec_rnn_forward.1} parent=1 // pred_fallthru
      _
    // Predicated region
    $region46: #{dec_rnn_forward.1} parent=1 // pred_check
      _
    $region47: #{dec_rnn_forward.1} parent=1 // pred_check_branch
      %48 = sbr.rel (0) target = $region49
    $region48: #{dec_rnn_forward.1} parent=1 // pred_region
      _
    $region49: #{dec_rnn_forward.1} parent=1 // pred_fallthru
      _
    // Predicated region
    $region50: #{dec_rnn_forward.1} parent=1 // pred_check
      _
    $region51: #{dec_rnn_forward.1} parent=1 // pred_check_branch
      %50 = sbr.rel (0) target = $region53
    $region52: #{dec_rnn_forward.1} parent=1 // pred_region
      _
    $region53: #{dec_rnn_forward.1} parent=1 // pred_fallthru
      _
    // Predicated region
    $region54: #{dec_rnn_forward.1} parent=1 // pred_check
      _
    $region55: #{dec_rnn_forward.1} parent=1 // pred_check_branch
      %52 = sbr.rel (0) target = $region57
    $region56: #{dec_rnn_forward.1} parent=1 // pred_region
      _
    $region57: #{dec_rnn_forward.1} parent=1 // pred_fallthru
      _
    // Predicated region
    $region58: #{dec_rnn_forward.1} parent=1 // pred_check
      _
    $region59: #{dec_rnn_forward.1} parent=1 // pred_check_branch
      %54 = sbr.rel (0) target = $region61
    $region60: #{dec_rnn_forward.1} parent=1 // pred_region
      _
    $region61: #{dec_rnn_forward.1} parent=1 // pred_fallthru
      _
    // Predicated region
    $region62: #{dec_rnn_forward.1} parent=1 // pred_check
      _
    $region63: #{dec_rnn_forward.1} parent=1 // pred_check_branch
      %56 = sbr.rel (0) target = $region65
    $region64: #{dec_rnn_forward.1} parent=1 // pred_region
      _
    $region65: #{dec_rnn_forward.1} parent=1 // pred_fallthru
      _
    // Predicated region
    $region66: #{dec_rnn_forward.1} parent=1 // pred_check
      _
    $region67: #{dec_rnn_forward.1} parent=1 // pred_check_branch
      %58 = sbr.rel (0) target = $region69
    $region68: #{dec_rnn_forward.1} parent=1 // pred_region
      _
    $region69: #{dec_rnn_forward.1} parent=1 // pred_fallthru
      _
    %v60 = vld [vmem:[%s0] sm:$0xff]
    %v61 = vld [vmem:[%s0 + $0x8] sm:$0xff]
    %v62 = vld [vmem:[%s0 + $0x10] sm:$0xff]
    %v63 = vld [vmem:[%s0 + $0x18] sm:$0xff]
    %v64 = vld [vmem:[%s0 + $0x20] sm:$0xff]
    %v65 = vld [vmem:[%s0 + $0x28] sm:$0xff]
    %vm66 = vcmask 130048
    %v67 = vsel %vm66, %v60, 0.0
    %v68 = vsel %vm66, %v61, 0.0
    %v69 = vadd.f32 %v67, %v68
    %v70 = vsel %vm66, %v62, 0.0
    %v71 = vadd.f32 %v69, %v70
    %v72 = vsel %vm66, %v63, 0.0
    %v73 = vadd.f32 %v71, %v72
    %v74 = vsel %vm66, %v64, 0.0
    %v75 = vadd.f32 %v73, %v74
    %v76 = vsel %vm66, %v65, 0.0
    %v77 = vadd.f32 %v75, %v76
    %v78 = vmul.f32 %v77, 0.16666667
    %v79 = vld [vmem:[%s1] sm:$0xff]
    %v80 = vpack.c.bf16 %v79, %v79
    %v81 = vpack.c.bf16 %v78, %v78
    %v82 = vld [vmem:[%s3] sm:$0xff]
    %v83 = vld [vmem:[%s4] sm:$0xff]
    %v84 = vpack.c.bf16 %v82, %v82
    %v85 = vld [vmem:[%s5] sm:$0xf]
    %v86 = vld [vmem:[%s5 + $0x4] sm:$0xf]
    %v87 = vld [vmem:[%s5 + $0x8] sm:$0xf]
    %v88 = vld [vmem:[%s6] sm:$0xf]
    %v89 = vld [vmem:[%s6 + $0x4] sm:$0xf]
    %v92 = vunpack.c.l.b16 %v88
    %v93 = vunpack.c.l.b16 %v89
    %v94 = vpack.c.b16 %v93, %v92
    %v97 = vsel %vm66, %v81, 0
    %99 = vmatprep.subr.bf16.mxu0 0
    %100 = vmatpush1.bf16.msra.mxu0 0
    %101 = vmatprep.subr.bf16.mxu0 0
    %102 = vmatpush1.bf16.msra.mxu0 0
    %103 = vmatprep.subr.bf16.mxu0 0
    %104 = vmatpush1.bf16.msra.mxu0 0
    %105 = vmatprep.subr.bf16.mxu0 0
    %106 = vmatpush1.bf16.msra.mxu0 0
    %107 = vmatprep.subr.bf16.mxu0 0
    %108 = vmatpush1.bf16.msra.mxu0 0
    %109 = vmatprep.subr.bf16.mxu0 0
    %110 = vmatpush1.bf16.msra.mxu0 0
    %111 = vmatprep.subr.bf16.mxu0 0
    %112 = vmatpush1.bf16.msra.mxu0 0
    %113 = vmatprep.subr.bf16.mxu0 0
    %114 = vmatpush1.bf16.msra.mxu0 %v94
    %115 = vmatprep.subr.bf16.mxu0 0
    %116 = vmatpush2.bf16.msra.mxu0 0
    %117 = vmatprep.subr.bf16.mxu0 0
    %118 = vmatpush2.bf16.msra.mxu0 0
    %119 = vmatprep.subr.bf16.mxu0 0
    %120 = vmatpush2.bf16.msra.mxu0 0
    %121 = vmatprep.subr.bf16.mxu0 0
    %122 = vmatpush2.bf16.msra.mxu0 0
    %123 = vmatprep.subr.bf16.mxu0 0
    %124 = vmatpush2.bf16.msra.mxu0 0
    %125 = vmatprep.subr.bf16.mxu0 0
    %126 = vmatpush2.bf16.msra.mxu0 0
    %127 = vmatprep.subr.bf16.mxu0 0
    %128 = vmatpush2.bf16.msra.mxu0 0
    %129 = vmatprep.subr.bf16.mxu0 0
    %130 = vmatpush2.bf16.msra.mxu0 0
    %131 = vmatprep.mubr.bf16.mxu0 0
    %132 = vmatmul.mubr.bf16.gmra.mxu0 %v97
    %v133 = vpop.f32.mrf.mxu0
    %v134 = vadd.f32 0.0, %v133
    %v135 = vpop.f32.mrf.mxu0
    %v136 = vpop.f32.mrf.mxu0
    %v137 = vpop.f32.mrf.mxu0
    %138 = vdwg.mxu0
    %v142 = vunpack.c.l.b16 %v85
    %v143 = vunpack.c.l.b16 %v86
    %v144 = vunpack.c.l.b16 %v87
    %v145 = vpack.c.b16 %v143, %v142
    %v146 = vpack.c.b16 %v144, %v144
    %vm148 = vcmask 195584
    %v150 = vsel %vm148, %v80, 0
    %vm152 = vcmask 1043456
    %v154 = vsel %vm152, %v146, 0
    %156 = vmatprep.subr.bf16.mxu0 0
    %157 = vmatpush1.bf16.msra.mxu0 0
    %158 = vmatprep.subr.bf16.mxu0 0
    %159 = vmatpush1.bf16.msra.mxu0 0
    %160 = vmatprep.subr.bf16.mxu0 0
    %161 = vmatpush1.bf16.msra.mxu0 0
    %162 = vmatprep.subr.bf16.mxu0 0
    %163 = vmatpush1.bf16.msra.mxu0 0
    %164 = vmatprep.subr.bf16.mxu0 0
    %165 = vmatpush1.bf16.msra.mxu0 0
    %166 = vmatprep.subr.bf16.mxu0 0
    %167 = vmatpush1.bf16.msra.mxu0 0
    %168 = vmatprep.subr.bf16.mxu0 0
    %169 = vmatpush1.bf16.msra.mxu0 %v154
    %170 = vmatprep.subr.bf16.mxu0 0
    %171 = vmatpush1.bf16.msra.mxu0 %v145
    %172 = vmatprep.subr.bf16.mxu0 0
    %173 = vmatpush2.bf16.msra.mxu0 0
    %174 = vmatprep.subr.bf16.mxu0 0
    %175 = vmatpush2.bf16.msra.mxu0 0
    %176 = vmatprep.subr.bf16.mxu0 0
    %177 = vmatpush2.bf16.msra.mxu0 0
    %178 = vmatprep.subr.bf16.mxu0 0
    %179 = vmatpush2.bf16.msra.mxu0 0
    %180 = vmatprep.subr.bf16.mxu0 0
    %181 = vmatpush2.bf16.msra.mxu0 0
    %182 = vmatprep.subr.bf16.mxu0 0
    %183 = vmatpush2.bf16.msra.mxu0 0
    %184 = vmatprep.subr.bf16.mxu0 0
    %185 = vmatpush2.bf16.msra.mxu0 0
    %186 = vmatprep.subr.bf16.mxu0 0
    %187 = vmatpush2.bf16.msra.mxu0 0
    %188 = vmatprep.mubr.bf16.mxu0 0
    %189 = vmatmul.mubr.bf16.gmra.mxu0 %v150
    %v190 = vpop.f32.mrf.mxu0
    %v191 = vadd.f32 %v134, %v190
    %v192 = vpop.f32.mrf.mxu0
    %v193 = vpop.f32.mrf.mxu0
    %v194 = vpop.f32.mrf.mxu0
    %195 = vdwg.mxu0
    %v196 = vld [vmem:[%s7] sm:$0xf]
    %v197 = vld [vmem:[%s7 + $0x4] sm:$0xf]
    %v198 = vld [vmem:[%s7 + $0x8] sm:$0xf]
    %v199 = vld [vmem:[%s7 + $0xc] sm:$0xf]
    %v204 = vunpack.c.l.b16 %v196
    %v205 = vunpack.c.l.b16 %v197
    %v206 = vunpack.c.l.b16 %v198
    %v207 = vunpack.c.l.b16 %v199
    %v208 = vpack.c.b16 %v205, %v204
    %v209 = vpack.c.b16 %v207, %v206
    %vm212 = vcmask 261120
    %v214 = vsel %vm212, %v84, 0
    %216 = vmatprep.subr.bf16.mxu0 0
    %217 = vmatpush1.bf16.msra.mxu0 0
    %218 = vmatprep.subr.bf16.mxu0 0
    %219 = vmatpush1.bf16.msra.mxu0 0
    %220 = vmatprep.subr.bf16.mxu0 0
    %221 = vmatpush1.bf16.msra.mxu0 0
    %222 = vmatprep.subr.bf16.mxu0 0
    %223 = vmatpush1.bf16.msra.mxu0 0
    %224 = vmatprep.subr.bf16.mxu0 0
    %225 = vmatpush1.bf16.msra.mxu0 0
    %226 = vmatprep.subr.bf16.mxu0 0
    %227 = vmatpush1.bf16.msra.mxu0 0
    %228 = vmatprep.subr.bf16.mxu0 0
    %229 = vmatpush1.bf16.msra.mxu0 %v209
    %230 = vmatprep.subr.bf16.mxu0 0
    %231 = vmatpush1.bf16.msra.mxu0 %v208
    %232 = vmatprep.subr.bf16.mxu0 0
    %233 = vmatpush2.bf16.msra.mxu0 0
    %234 = vmatprep.subr.bf16.mxu0 0
    %235 = vmatpush2.bf16.msra.mxu0 0
    %236 = vmatprep.subr.bf16.mxu0 0
    %237 = vmatpush2.bf16.msra.mxu0 0
    %238 = vmatprep.subr.bf16.mxu0 0
    %239 = vmatpush2.bf16.msra.mxu0 0
    %240 = vmatprep.subr.bf16.mxu0 0
    %241 = vmatpush2.bf16.msra.mxu0 0
    %242 = vmatprep.subr.bf16.mxu0 0
    %243 = vmatpush2.bf16.msra.mxu0 0
    %244 = vmatprep.subr.bf16.mxu0 0
    %245 = vmatpush2.bf16.msra.mxu0 0
    %246 = vmatprep.subr.bf16.mxu0 0
    %247 = vmatpush2.bf16.msra.mxu0 0
    %248 = vmatprep.mubr.bf16.mxu0 0
    %249 = vmatmul.mubr.bf16.gmra.mxu0 %v214
    %v250 = vpop.f32.mrf.mxu0
    %v251 = vadd.f32 0.0, %v250
    %v252 = vpop.f32.mrf.mxu0
    %v253 = vpop.f32.mrf.mxu0
    %v254 = vpop.f32.mrf.mxu0
    %255 = vdwg.mxu0
    %v256 = vadd.f32 %v191, %v251
    %v257 = vld [vmem:[%s8] sm:$0x1]
    %v259 = vlaneseq
    %v260 = vshrl.u32 %v259, 7
    %v261 = vsub.s32 0, %v260
    %v262 = vrot.slane %v257, %v261
    %v264 = vadd.f32 %v256, %v262
    %v265 = vxor.u32 %v264, 2147483648
    %v266 = vmul.f32 %v265, 1.442695
    %v267 = vpow.pop %v266
    %v268 = vadd.f32 %v267, 1.0
    %v269 = vrcp.pop %v268
    %v270 = vmul.f32 1.0, %v269
    %v271 = vtanh.pop %v264
    %273 = vrot.lane.b32.xlu0 %v83, 32
    %v274 = vpop.permute.xlu0 %273
    %v276 = vmul.f32 %v270, %v274
    %278 = vrot.lane.b32.xlu0 %v271, 64
    %v279 = vpop.permute.xlu0 %278
    %v281 = vmul.f32 %v270, %v279
    %283 = vrot.lane.b32.xlu0 %v281, 32
    %v284 = vpop.permute.xlu0 %283
    %v286 = vadd.f32 %v276, %v284
    %v287 = vtanh.pop %v286
    %289 = vrot.lane.b32.xlu0 %v287, 64
    %v290 = vpop.permute.xlu0 %289
    %v292 = vmul.f32 %v270, %v290
    %v293 = vpack.c.bf16 %v292, %v292
    %s294 = scalar_lea.vmem %s3, 8
    %v295 = vld [vmem:[%s294] sm:$0xff]
    %s296 = scalar_lea.vmem %s4, 8
    %v297 = vld [vmem:[%s296] sm:$0xff]
    %v298 = vpack.c.bf16 %v295, %v295
    %v299 = vld [vmem:[%s9] sm:$0xf]
    %v300 = vld [vmem:[%s9 + $0x4] sm:$0xf]
    %v301 = vld [vmem:[%s9 + $0x8] sm:$0xf]
    %v302 = vld [vmem:[%s9 + $0xc] sm:$0xf]
    %v303 = vld [vmem:[%s10] sm:$0xf]
    %v304 = vld [vmem:[%s10 + $0x4] sm:$0xf]
    %v305 = vld [vmem:[%s10 + $0x8] sm:$0xf]
    %v306 = vld [vmem:[%s10 + $0xc] sm:$0xf]
    %v311 = vunpack.c.l.b16 %v303
    %v312 = vunpack.c.l.b16 %v304
    %v313 = vunpack.c.l.b16 %v305
    %v314 = vunpack.c.l.b16 %v306
    %v315 = vpack.c.b16 %v312, %v311
    %v316 = vpack.c.b16 %v314, %v313
    %v320 = vsel %vm212, %v298, 0
    %322 = vmatprep.subr.bf16.mxu0 0
    %323 = vmatpush1.bf16.msra.mxu0 0
    %324 = vmatprep.subr.bf16.mxu0 0
    %325 = vmatpush1.bf16.msra.mxu0 0
    %326 = vmatprep.subr.bf16.mxu0 0
    %327 = vmatpush1.bf16.msra.mxu0 0
    %328 = vmatprep.subr.bf16.mxu0 0
    %329 = vmatpush1.bf16.msra.mxu0 0
    %330 = vmatprep.subr.bf16.mxu0 0
    %331 = vmatpush1.bf16.msra.mxu0 0
    %332 = vmatprep.subr.bf16.mxu0 0
    %333 = vmatpush1.bf16.msra.mxu0 0
    %334 = vmatprep.subr.bf16.mxu0 0
    %335 = vmatpush1.bf16.msra.mxu0 %v316
    %336 = vmatprep.subr.bf16.mxu0 0
    %337 = vmatpush1.bf16.msra.mxu0 %v315
    %338 = vmatprep.subr.bf16.mxu0 0
    %339 = vmatpush2.bf16.msra.mxu0 0
    %340 = vmatprep.subr.bf16.mxu0 0
    %341 = vmatpush2.bf16.msra.mxu0 0
    %342 = vmatprep.subr.bf16.mxu0 0
    %343 = vmatpush2.bf16.msra.mxu0 0
    %344 = vmatprep.subr.bf16.mxu0 0
    %345 = vmatpush2.bf16.msra.mxu0 0
    %346 = vmatprep.subr.bf16.mxu0 0
    %347 = vmatpush2.bf16.msra.mxu0 0
    %348 = vmatprep.subr.bf16.mxu0 0
    %349 = vmatpush2.bf16.msra.mxu0 0
    %350 = vmatprep.subr.bf16.mxu0 0
    %351 = vmatpush2.bf16.msra.mxu0 0
    %352 = vmatprep.subr.bf16.mxu0 0
    %353 = vmatpush2.bf16.msra.mxu0 0
    %354 = vmatprep.mubr.bf16.mxu0 0
    %355 = vmatmul.mubr.bf16.gmra.mxu0 %v320
    %v356 = vpop.f32.mrf.mxu0
    %v357 = vadd.f32 0.0, %v356
    %v358 = vpop.f32.mrf.mxu0
    %v359 = vpop.f32.mrf.mxu0
    %v360 = vpop.f32.mrf.mxu0
    %361 = vdwg.mxu0
    %363 = vrot.lane.b32.xlu0 %v293, 32
    %v364 = vpop.permute.xlu0 %363
    %v369 = vunpack.c.l.b16 %v299
    %v370 = vunpack.c.l.b16 %v300
    %v371 = vunpack.c.l.b16 %v301
    %v372 = vunpack.c.l.b16 %v302
    %v373 = vpack.c.b16 %v370, %v369
    %v374 = vpack.c.b16 %v372, %v371
    %v378 = vsel %vm212, %v364, 0
    %380 = vmatprep.subr.bf16.mxu0 0
    %381 = vmatpush1.bf16.msra.mxu0 0
    %382 = vmatprep.subr.bf16.mxu0 0
    %383 = vmatpush1.bf16.msra.mxu0 0
    %384 = vmatprep.subr.bf16.mxu0 0
    %385 = vmatpush1.bf16.msra.mxu0 0
    %386 = vmatprep.subr.bf16.mxu0 0
    %387 = vmatpush1.bf16.msra.mxu0 0
    %388 = vmatprep.subr.bf16.mxu0 0
    %389 = vmatpush1.bf16.msra.mxu0 0
    %390 = vmatprep.subr.bf16.mxu0 0
    %391 = vmatpush1.bf16.msra.mxu0 0
    %392 = vmatprep.subr.bf16.mxu0 0
    %393 = vmatpush1.bf16.msra.mxu0 %v374
    %394 = vmatprep.subr.bf16.mxu0 0
    %395 = vmatpush1.bf16.msra.mxu0 %v373
    %396 = vmatprep.subr.bf16.mxu0 0
    %397 = vmatpush2.bf16.msra.mxu0 0
    %398 = vmatprep.subr.bf16.mxu0 0
    %399 = vmatpush2.bf16.msra.mxu0 0
    %400 = vmatprep.subr.bf16.mxu0 0
    %401 = vmatpush2.bf16.msra.mxu0 0
    %402 = vmatprep.subr.bf16.mxu0 0
    %403 = vmatpush2.bf16.msra.mxu0 0
    %404 = vmatprep.subr.bf16.mxu0 0
    %405 = vmatpush2.bf16.msra.mxu0 0
    %406 = vmatprep.subr.bf16.mxu0 0
    %407 = vmatpush2.bf16.msra.mxu0 0
    %408 = vmatprep.subr.bf16.mxu0 0
    %409 = vmatpush2.bf16.msra.mxu0 0
    %410 = vmatprep.subr.bf16.mxu0 0
    %411 = vmatpush2.bf16.msra.mxu0 0
    %412 = vmatprep.mubr.bf16.mxu0 0
    %413 = vmatmul.mubr.bf16.gmra.mxu0 %v378
    %v414 = vpop.f32.mrf.mxu0
    %v415 = vadd.f32 %v357, %v414
    %v416 = vpop.f32.mrf.mxu0
    %v417 = vpop.f32.mrf.mxu0
    %v418 = vpop.f32.mrf.mxu0
    %419 = vdwg.mxu0
    %v420 = vld [vmem:[%s11] sm:$0x1]
    %v422 = vlaneseq
    %v423 = vshrl.u32 %v422, 7
    %v424 = vsub.s32 0, %v423
    %v425 = vrot.slane %v420, %v424
    %v427 = vadd.f32 %v415, %v425
    %v428 = vxor.u32 %v427, 2147483648
    %v429 = vmul.f32 %v428, 1.442695
    %v430 = vpow.pop %v429
    %v431 = vadd.f32 %v430, 1.0
    %v432 = vrcp.pop %v431
    %v433 = vmul.f32 1.0, %v432
    %v434 = vtanh.pop %v427
    %436 = vrot.lane.b32.xlu0 %v297, 32
    %v437 = vpop.permute.xlu0 %436
    %v439 = vmul.f32 %v433, %v437
    %441 = vrot.lane.b32.xlu0 %v434, 64
    %v442 = vpop.permute.xlu0 %441
    %v444 = vmul.f32 %v433, %v442
    %446 = vrot.lane.b32.xlu0 %v444, 32
    %v447 = vpop.permute.xlu0 %446
    %v449 = vadd.f32 %v439, %v447
    %v450 = vtanh.pop %v449
    %452 = vrot.lane.b32.xlu0 %v450, 64
    %v453 = vpop.permute.xlu0 %452
    %v455 = vmul.f32 %v433, %v453
    %457 = vrot.lane.b32.xlu0 %v292, 32
    %v458 = vpop.permute.xlu0 %457
    %460 = vst.msk [vmem:[%s18] sm:$0xff] %vm212, %v458
    %462 = vrot.lane.b32.xlu0 %v286, 32
    %v463 = vpop.permute.xlu0 %462
    %vm465 = vcmask 785920
    %466 = vst.msk [vmem:[%s18] sm:$0xff] %vm465, %v463
    %468 = vrot.lane.b32.xlu0 %v455, 64
    %v469 = vpop.permute.xlu0 %468
    %vm471 = vcmask 523520
    %472 = vst.msk [vmem:[%s18] sm:$0xff] %vm471, %v469
    %474 = vrot.lane.b32.xlu0 %v449, 64
    %v475 = vpop.permute.xlu0 %474
    %vm477 = vcmask 1048320
    %478 = vst.msk [vmem:[%s18] sm:$0xff] %vm477, %v475
    %v479 = vld [vmem:[%s2] sm:$0xff]
    %v480 = vld [vmem:[%s2 + $0x8] sm:$0xff]
    %v481 = vld [vmem:[%s2 + $0x10] sm:$0xff]
    %v482 = vld [vmem:[%s2 + $0x18] sm:$0xff]
    %v483 = vld [vmem:[%s2 + $0x20] sm:$0xff]
    %v484 = vld [vmem:[%s2 + $0x28] sm:$0xff]
    %v485 = vld [vmem:[%s2 + $0x30] sm:$0xff]
    %v486 = vld [vmem:[%s2 + $0x38] sm:$0xff]
    %v487 = vld [vmem:[%s2 + $0x40] sm:$0xff]
    %v488 = vld [vmem:[%s2 + $0x48] sm:$0xff]
    %499 = vrot.lane.b32.xlu0 %v479, 96
    %v500 = vpop.permute.xlu0 %499
    %501 = vrot.lane.b32.xlu0 %v480, 96
    %v502 = vpop.permute.xlu0 %501
    %503 = vrot.lane.b32.xlu0 %v481, 96
    %v504 = vpop.permute.xlu0 %503
    %505 = vrot.lane.b32.xlu0 %v482, 96
    %v506 = vpop.permute.xlu0 %505
    %507 = vrot.lane.b32.xlu0 %v483, 96
    %v508 = vpop.permute.xlu0 %507
    %509 = vrot.lane.b32.xlu0 %v484, 96
    %v510 = vpop.permute.xlu0 %509
    %511 = vrot.lane.b32.xlu0 %v485, 96
    %v512 = vpop.permute.xlu0 %511
    %513 = vrot.lane.b32.xlu0 %v486, 96
    %v514 = vpop.permute.xlu0 %513
    %515 = vrot.lane.b32.xlu0 %v487, 96
    %v516 = vpop.permute.xlu0 %515
    %517 = vrot.lane.b32.xlu0 %v488, 96
    %v518 = vpop.permute.xlu0 %517
    %v529 = vmul.f32 %v455, %v500
    %v530 = vmul.f32 %v455, %v502
    %v531 = vmul.f32 %v455, %v504
    %v532 = vmul.f32 %v455, %v506
    %v533 = vmul.f32 %v455, %v508
    %v534 = vmul.f32 %v455, %v510
    %v535 = vmul.f32 %v455, %v512
    %v536 = vmul.f32 %v455, %v514
    %v537 = vmul.f32 %v455, %v516
    %v538 = vmul.f32 %v455, %v518
    %549 = vrot.lane.b32.xlu0 %v529, 32
    %v550 = vpop.permute.xlu0 %549
    %551 = vrot.lane.b32.xlu0 %v530, 32
    %v552 = vpop.permute.xlu0 %551
    %553 = vrot.lane.b32.xlu0 %v531, 32
    %v554 = vpop.permute.xlu0 %553
    %555 = vrot.lane.b32.xlu0 %v532, 32
    %v556 = vpop.permute.xlu0 %555
    %557 = vrot.lane.b32.xlu0 %v533, 32
    %v558 = vpop.permute.xlu0 %557
    %559 = vrot.lane.b32.xlu0 %v534, 32
    %v560 = vpop.permute.xlu0 %559
    %561 = vrot.lane.b32.xlu0 %v535, 32
    %v562 = vpop.permute.xlu0 %561
    %563 = vrot.lane.b32.xlu0 %v536, 32
    %v564 = vpop.permute.xlu0 %563
    %565 = vrot.lane.b32.xlu0 %v537, 32
    %v566 = vpop.permute.xlu0 %565
    %567 = vrot.lane.b32.xlu0 %v538, 32
    %v568 = vpop.permute.xlu0 %567
    %v579 = vsel %vm212, %v550, 0.0
    %580 = vadd.xlane.f32.xlu0 %v579
    %v581 = vpop.xlane.xlu0 %580
    %v582 = vsel %vm212, %v552, 0.0
    %583 = vadd.xlane.f32.xlu0 %v582
    %v584 = vpop.xlane.xlu0 %583
    %v585 = vsel %vm212, %v554, 0.0
    %586 = vadd.xlane.f32.xlu0 %v585
    %v587 = vpop.xlane.xlu0 %586
    %v588 = vsel %vm212, %v556, 0.0
    %589 = vadd.xlane.f32.xlu0 %v588
    %v590 = vpop.xlane.xlu0 %589
    %v591 = vsel %vm212, %v558, 0.0
    %592 = vadd.xlane.f32.xlu0 %v591
    %v593 = vpop.xlane.xlu0 %592
    %v594 = vsel %vm212, %v560, 0.0
    %595 = vadd.xlane.f32.xlu0 %v594
    %v596 = vpop.xlane.xlu0 %595
    %v597 = vsel %vm212, %v562, 0.0
    %598 = vadd.xlane.f32.xlu0 %v597
    %v599 = vpop.xlane.xlu0 %598
    %v600 = vsel %vm212, %v564, 0.0
    %601 = vadd.xlane.f32.xlu0 %v600
    %v602 = vpop.xlane.xlu0 %601
    %v603 = vsel %vm212, %v566, 0.0
    %604 = vadd.xlane.f32.xlu0 %v603
    %v605 = vpop.xlane.xlu0 %604
    %v606 = vsel %vm212, %v568, 0.0
    %607 = vadd.xlane.f32.xlu0 %v606
    %v608 = vpop.xlane.xlu0 %607
    %v609 = vmax.f32 %v581, %v593
    %v610 = vmax.f32 %v584, %v596
    %v611 = vmax.f32 %v587, %v599
    %v612 = vmax.f32 %v590, %v602
    %v613 = vmax.f32 %v609, %v605
    %v614 = vmax.f32 %v610, %v608
    %v615 = vmax.f32 %v613, %v614
    %v616 = vmax.f32 %v611, %v612
    %v617 = vmax.f32 %v615, %v616
    %v618 = vsub.f32 %v581, %v617
    %v619 = vsub.f32 %v584, %v617
    %v620 = vsub.f32 %v587, %v617
    %v621 = vsub.f32 %v590, %v617
    %v622 = vsub.f32 %v593, %v617
    %v623 = vsub.f32 %v596, %v617
    %v624 = vsub.f32 %v599, %v617
    %v625 = vsub.f32 %v602, %v617
    %v626 = vsub.f32 %v605, %v617
    %v627 = vsub.f32 %v608, %v617
    %v628 = vmul.f32 %v618, 1.442695
    %v629 = vpow.pop %v628
    %v630 = vmul.f32 %v619, 1.442695
    %v631 = vpow.pop %v630
    %v632 = vmul.f32 %v620, 1.442695
    %v633 = vpow.pop %v632
    %v634 = vmul.f32 %v621, 1.442695
    %v635 = vpow.pop %v634
    %v636 = vmul.f32 %v622, 1.442695
    %v637 = vpow.pop %v636
    %v638 = vmul.f32 %v623, 1.442695
    %v639 = vpow.pop %v638
    %v640 = vmul.f32 %v624, 1.442695
    %v641 = vpow.pop %v640
    %v642 = vmul.f32 %v625, 1.442695
    %v643 = vpow.pop %v642
    %v644 = vmul.f32 %v626, 1.442695
    %v645 = vpow.pop %v644
    %v646 = vmul.f32 %v627, 1.442695
    %v647 = vpow.pop %v646
    %v648 = vadd.f32 %v629, %v631
    %v649 = vadd.f32 %v648, %v633
    %v650 = vadd.f32 %v649, %v635
    %v651 = vadd.f32 %v650, %v637
    %v652 = vadd.f32 %v651, %v639
    %v653 = vadd.f32 %v652, %v641
    %v654 = vadd.f32 %v653, %v643
    %v655 = vadd.f32 %v654, %v645
    %v656 = vadd.f32 %v655, %v647
    %v657 = vrcp.pop %v656
    %v658 = vmul.f32 %v629, %v657
    %v659 = vmul.f32 %v631, %v657
    %v660 = vmul.f32 %v633, %v657
    %v661 = vmul.f32 %v635, %v657
    %v662 = vmul.f32 %v637, %v657
    %v663 = vmul.f32 %v639, %v657
    %v664 = vmul.f32 %v641, %v657
    %v665 = vmul.f32 %v643, %v657
    %v666 = vmul.f32 %v645, %v657
    %v667 = vmul.f32 %v647, %v657
    %v668 = vmul.f32 %v658, %v479
    %v669 = vmul.f32 %v659, %v480
    %v670 = vmul.f32 %v660, %v481
    %v671 = vmul.f32 %v661, %v482
    %v672 = vmul.f32 %v662, %v483
    %v673 = vmul.f32 %v663, %v484
    %v674 = vmul.f32 %v664, %v485
    %v675 = vmul.f32 %v665, %v486
    %v676 = vmul.f32 %v666, %v487
    %v677 = vmul.f32 %v667, %v488
    %v678 = vsel %vm212, %v668, 0.0
    %v679 = vsel %vm212, %v669, 0.0
    %v680 = vadd.f32 %v678, %v679
    %v681 = vsel %vm212, %v670, 0.0
    %v682 = vadd.f32 %v680, %v681
    %v683 = vsel %vm212, %v671, 0.0
    %v684 = vadd.f32 %v682, %v683
    %v685 = vsel %vm212, %v672, 0.0
    %v686 = vadd.f32 %v684, %v685
    %v687 = vsel %vm212, %v673, 0.0
    %v688 = vadd.f32 %v686, %v687
    %v689 = vsel %vm212, %v674, 0.0
    %v690 = vadd.f32 %v688, %v689
    %v691 = vsel %vm212, %v675, 0.0
    %v692 = vadd.f32 %v690, %v691
    %v693 = vsel %vm212, %v676, 0.0
    %v694 = vadd.f32 %v692, %v693
    %v695 = vsel %vm212, %v677, 0.0
    %v696 = vadd.f32 %v694, %v695
    %v697 = vpack.c.bf16 %v455, %v455
    %v698 = vld [vmem:[%s12] sm:$0xf]
    %v699 = vld [vmem:[%s12 + $0x4] sm:$0xf]
    %v700 = vld [vmem:[%s12 + $0x8] sm:$0xf]
    %v701 = vld [vmem:[%s12 + $0xc] sm:$0xf]
    %v702 = vpack.c.bf16 %v696, %v696
    %v703 = vld [vmem:[%s13] sm:$0xf]
    %v704 = vld [vmem:[%s13 + $0x4] sm:$0xf]
    %v705 = vld [vmem:[%s13 + $0x8] sm:$0xf]
    %v706 = vld [vmem:[%s13 + $0xc] sm:$0xf]
    %v711 = vunpack.c.l.b16 %v703
    %v712 = vunpack.c.l.b16 %v704
    %v713 = vunpack.c.l.b16 %v705
    %v714 = vunpack.c.l.b16 %v706
    %v715 = vpack.c.b16 %v712, %v711
    %v716 = vpack.c.b16 %v714, %v713
    %v720 = vsel %vm212, %v702, 0
    %722 = vmatprep.subr.bf16.mxu0 0
    %723 = vmatpush1.bf16.msra.mxu0 0
    %724 = vmatprep.subr.bf16.mxu0 0
    %725 = vmatpush1.bf16.msra.mxu0 0
    %726 = vmatprep.subr.bf16.mxu0 0
    %727 = vmatpush1.bf16.msra.mxu0 0
    %728 = vmatprep.subr.bf16.mxu0 0
    %729 = vmatpush1.bf16.msra.mxu0 0
    %730 = vmatprep.subr.bf16.mxu0 0
    %731 = vmatpush1.bf16.msra.mxu0 0
    %732 = vmatprep.subr.bf16.mxu0 0
    %733 = vmatpush1.bf16.msra.mxu0 0
    %734 = vmatprep.subr.bf16.mxu0 0
    %735 = vmatpush1.bf16.msra.mxu0 %v716
    %736 = vmatprep.subr.bf16.mxu0 0
    %737 = vmatpush1.bf16.msra.mxu0 %v715
    %738 = vmatprep.subr.bf16.mxu0 0
    %739 = vmatpush2.bf16.msra.mxu0 0
    %740 = vmatprep.subr.bf16.mxu0 0
    %741 = vmatpush2.bf16.msra.mxu0 0
    %742 = vmatprep.subr.bf16.mxu0 0
    %743 = vmatpush2.bf16.msra.mxu0 0
    %744 = vmatprep.subr.bf16.mxu0 0
    %745 = vmatpush2.bf16.msra.mxu0 0
    %746 = vmatprep.subr.bf16.mxu0 0
    %747 = vmatpush2.bf16.msra.mxu0 0
    %748 = vmatprep.subr.bf16.mxu0 0
    %749 = vmatpush2.bf16.msra.mxu0 0
    %750 = vmatprep.subr.bf16.mxu0 0
    %751 = vmatpush2.bf16.msra.mxu0 0
    %752 = vmatprep.subr.bf16.mxu0 0
    %753 = vmatpush2.bf16.msra.mxu0 0
    %754 = vmatprep.mubr.bf16.mxu0 0
    %755 = vmatmul.mubr.bf16.gmra.mxu0 %v720
    %v756 = vpop.f32.mrf.mxu0
    %v757 = vadd.f32 0.0, %v756
    %v758 = vpop.f32.mrf.mxu0
    %v759 = vpop.f32.mrf.mxu0
    %v760 = vpop.f32.mrf.mxu0
    %761 = vdwg.mxu0
    %763 = vrot.lane.b32.xlu0 %v697, 32
    %v764 = vpop.permute.xlu0 %763
    %v769 = vunpack.c.l.b16 %v698
    %v770 = vunpack.c.l.b16 %v699
    %v771 = vunpack.c.l.b16 %v700
    %v772 = vunpack.c.l.b16 %v701
    %v773 = vpack.c.b16 %v770, %v769
    %v774 = vpack.c.b16 %v772, %v771
    %v778 = vsel %vm212, %v764, 0
    %780 = vmatprep.subr.bf16.mxu0 0
    %781 = vmatpush1.bf16.msra.mxu0 0
    %782 = vmatprep.subr.bf16.mxu0 0
    %783 = vmatpush1.bf16.msra.mxu0 0
    %784 = vmatprep.subr.bf16.mxu0 0
    %785 = vmatpush1.bf16.msra.mxu0 0
    %786 = vmatprep.subr.bf16.mxu0 0
    %787 = vmatpush1.bf16.msra.mxu0 0
    %788 = vmatprep.subr.bf16.mxu0 0
    %789 = vmatpush1.bf16.msra.mxu0 0
    %790 = vmatprep.subr.bf16.mxu0 0
    %791 = vmatpush1.bf16.msra.mxu0 0
    %792 = vmatprep.subr.bf16.mxu0 0
    %793 = vmatpush1.bf16.msra.mxu0 %v774
    %794 = vmatprep.subr.bf16.mxu0 0
    %795 = vmatpush1.bf16.msra.mxu0 %v773
    %796 = vmatprep.subr.bf16.mxu0 0
    %797 = vmatpush2.bf16.msra.mxu0 0
    %798 = vmatprep.subr.bf16.mxu0 0
    %799 = vmatpush2.bf16.msra.mxu0 0
    %800 = vmatprep.subr.bf16.mxu0 0
    %801 = vmatpush2.bf16.msra.mxu0 0
    %802 = vmatprep.subr.bf16.mxu0 0
    %803 = vmatpush2.bf16.msra.mxu0 0
    %804 = vmatprep.subr.bf16.mxu0 0
    %805 = vmatpush2.bf16.msra.mxu0 0
    %806 = vmatprep.subr.bf16.mxu0 0
    %807 = vmatpush2.bf16.msra.mxu0 0
    %808 = vmatprep.subr.bf16.mxu0 0
    %809 = vmatpush2.bf16.msra.mxu0 0
    %810 = vmatprep.subr.bf16.mxu0 0
    %811 = vmatpush2.bf16.msra.mxu0 0
    %812 = vmatprep.mubr.bf16.mxu0 0
    %813 = vmatmul.mubr.bf16.gmra.mxu0 %v778
    %v814 = vpop.f32.mrf.mxu0
    %v815 = vadd.f32 %v757, %v814
    %v816 = vpop.f32.mrf.mxu0
    %v817 = vpop.f32.mrf.mxu0
    %v818 = vpop.f32.mrf.mxu0
    %819 = vdwg.mxu0
    %v820 = vld [vmem:[%s14] sm:$0x1]
    %v822 = vlaneseq
    %v823 = vshrl.u32 %v822, 7
    %v824 = vsub.s32 0, %v823
    %v825 = vrot.slane %v820, %v824
    %v827 = vadd.f32 %v815, %v825
    %v828 = vtanh.pop %v827
    %v829 = vpack.c.bf16 %v828, %v828
    %v830 = vld [vmem:[%s15] sm:$0xf]
    %v831 = vld [vmem:[%s15 + $0x4] sm:$0xf]
    %v832 = vld [vmem:[%s15 + $0x8] sm:$0xf]
    %v833 = vld [vmem:[%s15 + $0xc] sm:$0xf]
    %v834 = vld [vmem:[%s16] sm:$0x1]
    %v836 = vlaneseq
    %v837 = vshrl.u32 %v836, 7
    %v838 = vsub.s32 0, %v837
    %v839 = vrot.slane %v834, %v838
    %v845 = vunpack.c.l.b16 %v830
    %v846 = vunpack.c.l.b16 %v831
    %v847 = vunpack.c.l.b16 %v832
    %v848 = vunpack.c.l.b16 %v833
    %v849 = vpack.c.b16 %v846, %v845
    %v850 = vpack.c.b16 %v848, %v847
    %v854 = vsel %vm212, %v829, 0
    %856 = vmatprep.subr.bf16.mxu0 0
    %857 = vmatpush1.bf16.msra.mxu0 0
    %858 = vmatprep.subr.bf16.mxu0 0
    %859 = vmatpush1.bf16.msra.mxu0 0
    %860 = vmatprep.subr.bf16.mxu0 0
    %861 = vmatpush1.bf16.msra.mxu0 0
    %862 = vmatprep.subr.bf16.mxu0 0
    %863 = vmatpush1.bf16.msra.mxu0 0
    %864 = vmatprep.subr.bf16.mxu0 0
    %865 = vmatpush1.bf16.msra.mxu0 0
    %866 = vmatprep.subr.bf16.mxu0 0
    %867 = vmatpush1.bf16.msra.mxu0 0
    %868 = vmatprep.subr.bf16.mxu0 0
    %869 = vmatpush1.bf16.msra.mxu0 %v850
    %870 = vmatprep.subr.bf16.mxu0 0
    %871 = vmatpush1.bf16.msra.mxu0 %v849
    %872 = vmatprep.subr.bf16.mxu0 0
    %873 = vmatpush2.bf16.msra.mxu0 0
    %874 = vmatprep.subr.bf16.mxu0 0
    %875 = vmatpush2.bf16.msra.mxu0 0
    %876 = vmatprep.subr.bf16.mxu0 0
    %877 = vmatpush2.bf16.msra.mxu0 0
    %878 = vmatprep.subr.bf16.mxu0 0
    %879 = vmatpush2.bf16.msra.mxu0 0
    %880 = vmatprep.subr.bf16.mxu0 0
    %881 = vmatpush2.bf16.msra.mxu0 0
    %882 = vmatprep.subr.bf16.mxu0 0
    %883 = vmatpush2.bf16.msra.mxu0 0
    %884 = vmatprep.subr.bf16.mxu0 0
    %885 = vmatpush2.bf16.msra.mxu0 0
    %886 = vmatprep.subr.bf16.mxu0 0
    %887 = vmatpush2.bf16.msra.mxu0 0
    %888 = vmatprep.mubr.bf16.mxu0 0
    %889 = vmatmul.mubr.bf16.gmra.mxu0 %v854
    %v890 = vpop.f32.mrf.mxu0
    %v891 = vadd.f32 %v839, %v890
    %v892 = vpop.f32.mrf.mxu0
    %v893 = vpop.f32.mrf.mxu0
    %v894 = vpop.f32.mrf.mxu0
    %895 = vdwg.mxu0
    %896 = vst [vmem:[#allocation2] sm:$0xff] %v891
    // Predicated region
    $region70: #{dec_rnn_forward.1} parent=1 // pred_check
      _
    $region71: #{dec_rnn_forward.1} parent=1 // pred_check_branch
      %898 = sbr.rel (0) target = $region73
    $region72: #{dec_rnn_forward.1} parent=1 // pred_region
      %s900 = ssub.s32 128, 128
      %901 = vsyncadd [#allocation3], %s900
      %s903 = sshll.u32 [#allocation2], 4
      %s904 = int_to_ptr.vmem [resolvable:$true] %s903
      %906 = dma.vmem_to_hbm [thread:$0]  %s904, 128, %s17, [#allocation3]
    $region73: #{dec_rnn_forward.1} parent=1 // pred_fallthru
      _
    // Predicated region
    $region74: #{dec_rnn_forward.1} parent=1 // pred_check
      _
    $region75: #{dec_rnn_forward.1} parent=1 // pred_check_branch
      %908 = sbr.rel (0) target = $region77
    $region76: #{dec_rnn_forward.1} parent=1 // pred_region
      _
    $region77: #{dec_rnn_forward.1} parent=1 // pred_fallthru
      _
    // Predicated region
    $region78: #{dec_rnn_forward.1} parent=1 // pred_check
      _
    $region79: #{dec_rnn_forward.1} parent=1 // pred_check_branch
      %910 = sbr.rel (0) target = $region81
    $region80: #{dec_rnn_forward.1} parent=1 // pred_region
      %911 = dma.done [#allocation3], 128
    $region81: #{dec_rnn_forward.1} parent=1 // pred_fallthru
      _
    // Predicated region
    $region82: #{dec_rnn_forward.1} parent=1 // pred_check
      _
    $region83: #{dec_rnn_forward.1} parent=1 // pred_check_branch
      %913 = sbr.rel (0) target = $region85
    $region84: #{dec_rnn_forward.1} parent=1 // pred_region
      _
    $region85: #{dec_rnn_forward.1} parent=1 // pred_fallthru
      _
    %914 = vsyncpa [#allocation3], 1

</llo_original>
